<compile_context>
chip_gen: v7x
topology: tpu7x:2x2x1
jax: 0.10.0
libtpu: 0.0.40
codegen_flags: <defaults>
</compile_context>

<pallas_src>
import functools

import jax
import jax.numpy as jnp
from jax import lax
from jax.experimental import pallas as pl
from jax.experimental.pallas import tpu as pltpu

LANES = 128
SUBLANES = 8
MAX_BLOCK_ROWS = 4096   # (4096, 128) f32 = 2 MiB per streamed buffer
CHUNK_ROWS = 512        # in-kernel elementwise sub-chunk (bounds VMEM temporaries)


def _round_up(x, m):
    return ((x + m - 1) // m) * m


def _min_sublane_multiple(dtype):
    size = jnp.dtype(dtype).itemsize
    if size >= 4:
        return 8
    if size == 2:
        return 16
    return 32


def _pow_pair(p, one_m_p, log_p, log_1mp, gamma):
    """(p**gamma, (1-p)**gamma) via the cheapest unit for the given gamma."""
    g = float(gamma)
    if g == 0.0:
        one = jnp.ones_like(p)
        return one, one
    if g.is_integer() and 1.0 <= g <= 8.0:
        def ipow(x):
            r = x
            for _ in range(int(g) - 1):
                r = r * x
            return r
        return ipow(p), ipow(one_m_p)
    # Fractional gamma: reuse the logs already needed for the loss terms
    # (2 extra EUP exp instead of 2 extra log + 2 exp from jnp.power).
    # Uses log(x + eps) instead of log(x); deviation is O(eps).
    gf = jnp.float32(g)
    return jnp.exp(gf * log_p), jnp.exp(gf * log_1mp)


def _tile_loss(p_raw, y_raw, alpha, gamma):
    """Elementwise binary focal loss on one (chunk_rows, 128) tile, in f32."""
    eps = jnp.float32(1e-07)
    p = p_raw.astype(jnp.float32)
    y = y_raw.astype(jnp.float32)
    one_m_p = 1.0 - p
    log_p = jnp.log(p + eps)
    log_1mp = jnp.log(one_m_p + eps)
    p_pow, one_m_p_pow = _pow_pair(p, one_m_p, log_p, log_1mp, gamma)
    a = jnp.float32(alpha)
    # TODO(synk): for guaranteed-hard {0,1} labels a single-log (pt) form would
    # halve EUP work; the two-term form is kept to stay exact for soft labels.
    loss_y1 = (-a) * one_m_p_pow * log_p * y
    loss_y0 = (a - jnp.float32(1.0)) * p_pow * log_1mp * (1.0 - y)
    return loss_y0 + loss_y1


def _focal_kernel(p_ref, y_ref, out_ref, *, alpha, gamma, n_elems, block_rows,
                  chunk_rows, steps_per_core, total_blocks, has_phantom,
                  has_tail):
    c = pl.program_id(0)   # parallel shard (TensorCore on v7x)
    i = pl.program_id(1)   # sequential row-tile within the shard
    blk = c * steps_per_core + i

    @pl.when(i == 0)
    def _init():
        out_ref[...] = jnp.zeros_like(out_ref)

    num_chunks = block_rows // chunk_rows
    full_rows = n_elems // LANES   # rows whose 128 lanes are all valid
    rem_lanes = n_elems % LANES    # valid lanes in the (optional) partial row

    def tile_contrib(p_tile, y_tile, row_off, mask_tail):
        loss = _tile_loss(p_tile, y_tile, alpha, gamma)
        if mask_tail:
            # Row-granular global index: never overflows int32 (rows <= ~2^27
            # even for HBM-filling tensors).
            grow = (blk * block_rows + row_off
                    + lax.broadcasted_iota(jnp.int32, loss.shape, 0))
            valid = grow < full_rows
            if rem_lanes:
                lane = lax.broadcasted_iota(jnp.int32, loss.shape, 1)
                valid = valid | ((grow == full_rows) & (lane < rem_lanes))
            loss = jnp.where(valid, loss, jnp.float32(0.0))
        # VALU-only fold into an (8,128) partial; no cross-lane reduce here.
        return loss.reshape(-1, SUBLANES, LANES).sum(axis=0)

    def accumulate(mask_tail):
        if num_chunks == 1:
            acc = tile_contrib(p_ref[...], y_ref[...], 0, mask_tail)
        else:
            def body(k, acc):
                r0 = pl.multiple_of(k * chunk_rows, chunk_rows)
                return acc + tile_contrib(p_ref[pl.ds(r0, chunk_rows), :],
                                          y_ref[pl.ds(r0, chunk_rows), :],
                                          r0, mask_tail)
            acc = lax.fori_loop(0, num_chunks, body,
                                jnp.zeros((SUBLANES, LANES), jnp.float32),
                                unroll=True)
        out_ref[...] = out_ref[...] + acc.reshape(1, SUBLANES, LANES)

    is_last = blk == (total_blocks - 1)
    if has_tail:
        # Only the final real block pays for masking.
        @pl.when(is_last)
        def _boundary():
            accumulate(True)

        if has_phantom:
            no_mask = (blk != total_blocks - 1) & (blk < total_blocks)
        else:
            no_mask = blk != total_blocks - 1

        @pl.when(no_mask)
        def _full():
            accumulate(False)
    elif has_phantom:
        @pl.when(blk < total_blocks)
        def _full():
            accumulate(False)
    else:
        accumulate(False)


def _num_tensorcores():
    """Best-effort TensorCore count per chip (2 on v7x); safe fallback of 2."""
    try:
        info = pltpu.get_tpu_info()
        for name in ("num_cores", "core_count", "num_tensorcores",
                     "tensorcore_count", "cores_per_chip"):
            v = getattr(info, name, None)
            if isinstance(v, int) and v > 0:
                return v
    except Exception:
        pass
    return 2   # harmless on single-TC chips now that splits forces no padding


def binary_focal_loss(preds, labels, alpha=0.25, gamma=2.0):
    """Pallas TPU implementation of BinaryFocalLoss.forward (scalar mean)."""
    assert preds.shape == labels.shape
    n_elems = preds.size

    flat_p = preds.reshape(-1)
    flat_y = labels.reshape(-1)

    rows_total = pl.cdiv(n_elems, LANES)
    rem = n_elems % LANES
    if rem:
        # Rare ragged tail: pad by < 128 elements only (tiny copy).  Zero pads
        # are exactly zero-loss for gamma >= 1 and are lane-masked in-kernel.
        pad = LANES - rem
        flat_p = jnp.pad(flat_p, (0, pad))
        flat_y = jnp.pad(flat_y, (0, pad))

    p2 = flat_p.reshape(rows_total, LANES)
    y2 = flat_y.reshape(rows_total, LANES)

    sub = max(_min_sublane_multiple(preds.dtype),
              _min_sublane_multiple(labels.dtype))
    if rows_total <= CHUNK_ROWS:
        block_rows = _round_up(rows_total, sub)
        chunk_rows = block_rows
    else:
        block_rows = min(MAX_BLOCK_ROWS, _round_up(rows_total, CHUNK_ROWS))
        chunk_rows = CHUNK_ROWS

    total_blocks = pl.cdiv(rows_total, block_rows)
    splits = 2 if (total_blocks >= 2 and _num_tensorcores() >= 2) else 1
    steps_per_core = pl.cdiv(total_blocks, splits)
    has_phantom = steps_per_core * splits != total_blocks
    has_tail = total_blocks * block_rows * LANES != n_elems

    def in_map(c, i):
        blk = c * steps_per_core + i
        if has_phantom:
            blk = jnp.minimum(blk, total_blocks - 1)   # phantom steps re-read last block
        return (blk, 0)

    kernel = functools.partial(
        _focal_kernel,
        alpha=float(alpha), gamma=float(gamma), n_elems=n_elems,
        block_rows=block_rows, chunk_rows=chunk_rows,
        steps_per_core=steps_per_core, total_blocks=total_blocks,
        has_phantom=has_phantom, has_tail=has_tail)

    partials = pl.pallas_call(
        kernel,
        out_shape=jax.ShapeDtypeStruct((splits, SUBLANES, LANES), jnp.float32),
        grid_spec=pltpu.PrefetchScalarGridSpec(
            num_scalar_prefetch=0,
            grid=(splits, steps_per_core),
            in_specs=[pl.BlockSpec((block_rows, LANES), in_map),
                      pl.BlockSpec((block_rows, LANES), in_map)],
            out_specs=pl.BlockSpec((1, SUBLANES, LANES),
                                   lambda c, i: (c, 0, 0)),
        ),
        compiler_params=pltpu.CompilerParams(
            dimension_semantics=("parallel", "arbitrary"),
            vmem_limit_bytes=32 * 1024 * 1024,
        ),
    )(p2, y2)

    return (jnp.sum(partials) / jnp.float32(n_elems)).astype(jnp.float32)


def _reference(preds, labels, alpha=0.25, gamma=2.0):
    eps = 1e-07
    loss_y1 = -alpha * jnp.power(1.0 - preds, gamma) * jnp.log(preds + eps) * labels
    loss_y0 = -(1.0 - alpha) * jnp.power(preds, gamma) * jnp.log(1.0 - preds + eps) * (1.0 - labels)
    return jnp.mean(loss_y0 + loss_y1)


if __name__ == "__main__":
    key = jax.random.PRNGKey(0)
    k1, k2 = jax.random.split(key)

    # Primary check — NCHW inputs: batch=2, channels=4, spatial=16x16.
    shape = (2, 4, 16, 16)
    preds = jax.nn.sigmoid(jax.random.normal(k1, shape, dtype=jnp.float32))
    labels = (jax.random.uniform(k2, shape) > 0.5).astype(jnp.float32)

    out = binary_focal_loss(preds, labels, alpha=0.25, gamma=2.0)
    out = jax.block_until_ready(out)
    ref = _reference(preds, labels, alpha=0.25, gamma=2.0)
    assert jnp.allclose(out, ref, rtol=1e-5, atol=1e-6), (out, ref)

    # Extra coverage: ragged element count (exercises the lane mask / tiny pad).
    shape2 = (3, 5, 40, 56)   # 33600 elements, not a multiple of 128
    p2 = jax.nn.sigmoid(jax.random.normal(k1, shape2, dtype=jnp.float32))
    y2 = (jax.random.uniform(k2, shape2) > 0.5).astype(jnp.float32)
    out2 = jax.block_until_ready(binary_focal_loss(p2, y2))
    ref2 = _reference(p2, y2)
    assert jnp.allclose(out2, ref2, rtol=5e-5, atol=1e-6), (out2, ref2)

    # Extra coverage: multi-chunk block with a partial boundary block.
    shape3 = (4, 4, 80, 112)  # 143360 elements -> 1120 rows, 3 sub-chunks
    p3 = jax.nn.sigmoid(jax.random.normal(k1, shape3, dtype=jnp.float32))
    y3 = (jax.random.uniform(k2, shape3) > 0.5).astype(jnp.float32)
    out3 = jax.block_until_ready(binary_focal_loss(p3, y3))
    ref3 = _reference(p3, y3)
    assert jnp.allclose(out3, ref3, rtol=5e-5, atol=1e-6), (out3, ref3)

    print("KERNEL_OK")
</pallas_src>

<mosaic_0001>
module attributes {stable_mosaic.version = 11 : i64} {
  func.func @_focal_kernel(%arg0: i32, %arg1: i32, %arg2: memref<16x128xf32, #tpu.memory_space<vmem>>, %arg3: memref<16x128xf32, #tpu.memory_space<vmem>>, %arg4: memref<1x8x128xf32, #tpu.memory_space<vmem>>) attributes {dimension_semantics = [#tpu.dimension_semantics<parallel>, #tpu.dimension_semantics<arbitrary>], iteration_bounds = array<i64: 1, 1>, scalar_prefetch = 0 : i64, scratch_operands = 0 : i64, tpu.core_type = #tpu.core_type<tc>, window_params = [{transform_indices = @transform_0, window_bounds = array<i64: 16, 128>}, {transform_indices = @transform_1, window_bounds = array<i64: 16, 128>}, {transform_indices = @transform_2, window_bounds = array<i64: 1, 8, 128>}]} {
    %c0_i32 = arith.constant 0 : i32
    %0 = arith.cmpi eq, %arg1, %c0_i32 : i32
    %1 = arith.extui %0 : i1 to i32
    %c0_i32_0 = arith.constant 0 : i32
    %2 = arith.cmpi ne, %1, %c0_i32_0 : i32
    scf.if %2 {
      %cst_18 = arith.constant 0.000000e+00 : f32
      %34 = vector.broadcast %cst_18 : f32 to vector<1x8x128xf32>
      %c0_19 = arith.constant 0 : index
      %c0_20 = arith.constant 0 : index
      %c0_21 = arith.constant 0 : index
      %35 = vector.load %arg4[%c0_19, %c0_20, %c0_21] : memref<1x8x128xf32, #tpu.memory_space<vmem>>, vector<1x8x128xf32>
      tpu.vector_store %arg4[%c0_19, %c0_20, %c0_21], %34 {strides = array<i32>} : memref<1x8x128xf32, #tpu.memory_space<vmem>>, vector<1x8x128xf32>,
    } else {
    }
    %c0 = arith.constant 0 : index
    %c0_1 = arith.constant 0 : index
    %3 = vector.load %arg2[%c0, %c0_1] : memref<16x128xf32, #tpu.memory_space<vmem>>, vector<16x128xf32>
    %c0_2 = arith.constant 0 : index
    %c0_3 = arith.constant 0 : index
    %4 = vector.load %arg3[%c0_2, %c0_3] : memref<16x128xf32, #tpu.memory_space<vmem>>, vector<16x128xf32>
    %cst = arith.constant 1.000000e+00 : f32
    %5 = vector.broadcast %cst : f32 to vector<16x128xf32>
    %6 = arith.subf %5, %3 : vector<16x128xf32>
    %cst_4 = arith.constant 1.000000e-07 : f32
    %7 = vector.broadcast %cst_4 : f32 to vector<16x128xf32>
    %8 = arith.addf %3, %7 : vector<16x128xf32>
    %9 = math.log %8 : vector<16x128xf32>
    %cst_5 = arith.constant 1.000000e-07 : f32
    %10 = vector.broadcast %cst_5 : f32 to vector<16x128xf32>
    %11 = arith.addf %6, %10 : vector<16x128xf32>
    %12 = math.log %11 : vector<16x128xf32>
    %13 = arith.mulf %3, %3 : vector<16x128xf32>
    %14 = arith.mulf %6, %6 : vector<16x128xf32>
    %cst_6 = arith.constant 0.000000e+00 : f32
    %cst_7 = arith.constant 2.500000e-01 : f32
    %15 = arith.subf %cst_6, %cst_7 : f32
    %16 = vector.broadcast %15 : f32 to vector<16x128xf32>
    %17 = arith.mulf %16, %14 : vector<16x128xf32>
    %18 = arith.mulf %17, %9 : vector<16x128xf32>
    %19 = arith.mulf %18, %4 : vector<16x128xf32>
    %cst_8 = arith.constant 2.500000e-01 : f32
    %cst_9 = arith.constant 1.000000e+00 : f32
    %20 = arith.subf %cst_8, %cst_9 : f32
    %21 = vector.broadcast %20 : f32 to vector<16x128xf32>
    %22 = arith.mulf %21, %13 : vector<16x128xf32>
    %23 = arith.mulf %22, %12 : vector<16x128xf32>
    %cst_10 = arith.constant 1.000000e+00 : f32
    %24 = vector.broadcast %cst_10 : f32 to vector<16x128xf32>
    %25 = arith.subf %24, %4 : vector<16x128xf32>
    %26 = arith.mulf %23, %25 : vector<16x128xf32>
    %27 = arith.addf %26, %19 : vector<16x128xf32>
    %28 = vector.shape_cast %27 : vector<16x128xf32> to vector<2x8x128xf32>
    %cst_11 = arith.constant dense<0.000000e+00> : vector<8x128xf32>
    %29 = vector.multi_reduction <add>, %28, %cst_11 [0] : vector<2x8x128xf32> to vector<8x128xf32>
    %c0_12 = arith.constant 0 : index
    %c0_13 = arith.constant 0 : index
    %c0_14 = arith.constant 0 : index
    %30 = vector.load %arg4[%c0_12, %c0_13, %c0_14] : memref<1x8x128xf32, #tpu.memory_space<vmem>>, vector<1x8x128xf32>
    %31 = vector.shape_cast %29 : vector<8x128xf32> to vector<1x8x128xf32>
    %32 = arith.addf %30, %31 : vector<1x8x128xf32>
    %c0_15 = arith.constant 0 : index
    %c0_16 = arith.constant 0 : index
    %c0_17 = arith.constant 0 : index
    %33 = vector.load %arg4[%c0_15, %c0_16, %c0_17] : memref<1x8x128xf32, #tpu.memory_space<vmem>>, vector<1x8x128xf32>
    tpu.vector_store %arg4[%c0_15, %c0_16, %c0_17], %32 {strides = array<i32>} : memref<1x8x128xf32, #tpu.memory_space<vmem>>, vector<1x8x128xf32>,
    return
  }
  func.func @transform_0(%arg0: i32, %arg1: i32) -> (i32, i32) {
    %c1_i32 = arith.constant 1 : i32
    %0 = arith.muli %arg0, %c1_i32 : i32
    %1 = arith.addi %0, %arg1 : i32
    %c0_i32 = arith.constant 0 : i32
    %c0_i32_0 = arith.constant 0 : i32
    return %1, %c0_i32 : i32, i32
  }
  func.func @transform_1(%arg0: i32, %arg1: i32) -> (i32, i32) {
    %c1_i32 = arith.constant 1 : i32
    %0 = arith.muli %arg0, %c1_i32 : i32
    %1 = arith.addi %0, %arg1 : i32
    %c0_i32 = arith.constant 0 : i32
    %c0_i32_0 = arith.constant 0 : i32
    return %1, %c0_i32 : i32, i32
  }
  func.func @transform_2(%arg0: i32, %arg1: i32) -> (i32, i32, i32) {
    %c0_i32 = arith.constant 0 : i32
    %c0_i32_0 = arith.constant 0 : i32
    %c0_i32_1 = arith.constant 0 : i32
    return %arg0, %c0_i32, %c0_i32_0 : i32, i32, i32
  }
}

</mosaic_0001>

<llo_original>
// kernel: tpu_custom_call.1
$region0: #{tpu_custom_call.1}
  #allocation0 [shape = 'u32[]', space=smem, size = 0x4, offset = 0x4, fixed_abs, tag = 'smem constant byte address 0x4 - core index']
  #allocation1 [shape = 'u32[144,128]{1,0:T(1,128)}', space=vmem, size = 0x12000, scoped, tag = 'internal scratch']
  %s0 = inlined_call_operand.hbm [shape: f32[16,128], index: 0, kind: input, shape index: {}]
  %s1 = inlined_call_operand.hbm [shape: f32[16,128], index: 1, kind: input, shape index: {}]
  %s2 = inlined_call_operand.hbm [shape: f32[1,8,128], index: 2, kind: output, shape index: {}]
  %s3 = sld [smem:[#allocation0]]
  $region30: #{tpu_custom_call.1} parent=0
    _
  %s5 = ssub.s32 1, %s3
  %s6 = scalar_select 0, %s5, %s3
  $region1: #{tpu_custom_call.1} parent=0
    #allocation2 [shape = 'u8[8192]{0}', space=vmem, size = 0x2000, scoped, tag = 'input window, operand 0, single buffered']
    #allocation3 [shape = 's32[1]{0}', space=sflag, size = 0x4, scoped, tag = 'scoped memory for tpu_custom_call.1']
    #allocation4 [shape = 's32[1]{0}', space=sflag, size = 0x4, scoped, tag = 'scoped memory for tpu_custom_call.1']
    #allocation5 [shape = 'u8[8192]{0}', space=vmem, size = 0x2000, scoped, tag = 'input window, operand 1, single buffered']
    #allocation6 [shape = 's32[1]{0}', space=sflag, size = 0x4, scoped, tag = 'scoped memory for tpu_custom_call.1']
    #allocation7 [shape = 'u8[4096]{0}', space=vmem, size = 0x1000, scoped, tag = 'output window, operand 0, single buffered']
    %7 = vsyncpa [#allocation3], 0
    %8 = vsyncpa [#allocation6], 0
    %9 = vsyncpa [#allocation4], 0
    // Predicated region
    $region2: #{tpu_custom_call.1} parent=1 // pred_check
      _
    $region3: #{tpu_custom_call.1} parent=1 // pred_check_branch
      %11 = sbr.rel (0) target = $region5
    $region4: #{tpu_custom_call.1} parent=1 // pred_region
      %s12 = sadd.s32 0, 0
      %s13 = smul.u32 2, %s12
      %s15 = ssub.s32 256, 256
      %16 = vsyncadd [#allocation3], %s15
      %s17 = smul.addr %s13, 128
      %s18 = scalar_lea.hbm %s0, %s17
      %s19 = sshll.u32 [#allocation2], 4
      %s20 = int_to_ptr.vmem [resolvable:$true] %s19
      %25 = dma.hbm_to_vmem [thread:$0]  %s18, 256, %s20, [#allocation3], 128, 128, 8
    $region5: #{tpu_custom_call.1} parent=1 // pred_fallthru
      _
    // Predicated region
    $region6: #{tpu_custom_call.1} parent=1 // pred_check
      _
    $region7: #{tpu_custom_call.1} parent=1 // pred_check_branch
      %27 = sbr.rel (0) target = $region9
    $region8: #{tpu_custom_call.1} parent=1 // pred_region
      %s28 = sadd.s32 0, 0
      %s29 = smul.u32 2, %s28
      %s31 = ssub.s32 256, 256
      %32 = vsyncadd [#allocation6], %s31
      %s33 = smul.addr %s29, 128
      %s34 = scalar_lea.hbm %s1, %s33
      %s35 = sshll.u32 [#allocation5], 4
      %s36 = int_to_ptr.vmem [resolvable:$true] %s35
      %41 = dma.hbm_to_vmem [thread:$0]  %s34, 256, %s36, [#allocation6], 128, 128, 8
    $region9: #{tpu_custom_call.1} parent=1 // pred_fallthru
      _
    // Predicated region
    $region10: #{tpu_custom_call.1} parent=1 // pred_check
      _
    $region11: #{tpu_custom_call.1} parent=1 // pred_check_branch
      %43 = sbr.rel (0) target = $region13
    $region12: #{tpu_custom_call.1} parent=1 // pred_region
      %44 = dma.done [#allocation3], 256
    $region13: #{tpu_custom_call.1} parent=1 // pred_fallthru
      _
    // Predicated region
    $region14: #{tpu_custom_call.1} parent=1 // pred_check
      _
    $region15: #{tpu_custom_call.1} parent=1 // pred_check_branch
      %46 = sbr.rel (0) target = $region17
    $region16: #{tpu_custom_call.1} parent=1 // pred_region
      %47 = dma.done [#allocation6], 256
    $region17: #{tpu_custom_call.1} parent=1 // pred_fallthru
      _
    %s48 = sadd.s32 0, 0
    %s49 = smul.u32 2, %s48
    %s50 = sadd.s32 0, 0
    %s51 = smul.u32 2, %s50
    %p52 = scmp.eq.s32.totalorder 0, 0
    // Predicated region
    $region18: #{tpu_custom_call.1} parent=1 // pred_check
      %p53 = pneg %p52
    $region19: #{tpu_custom_call.1} parent=1 // pred_check_branch
      %55 = sbr.rel (%p53) target = $region21
    $region20: #{tpu_custom_call.1} parent=1 // pred_region
      %56 = vst [vmem:[#allocation7] sm:$0xff] 0.0
    $region21: #{tpu_custom_call.1} parent=1 // pred_fallthru
      _
    %v57 = vld [vmem:[#allocation2] sm:$0xff]
    %v58 = vld [vmem:[#allocation2 + $0x8] sm:$0xff]
    %v59 = vld [vmem:[#allocation5] sm:$0xff]
    %v60 = vld [vmem:[#allocation5 + $0x8] sm:$0xff]
    %v61 = vsub.f32 1.0, %v57
    %v62 = vsub.f32 1.0, %v58
    %v63 = vadd.f32 %v57, 1e-07
    %v64 = vadd.f32 %v58, 1e-07
    %v65 = vlog2.pop %v63
    %v66 = vmul.f32 %v65, 0.6931472
    %v67 = vlog2.pop %v64
    %v68 = vmul.f32 %v67, 0.6931472
    %v69 = vadd.f32 %v61, 1e-07
    %v70 = vadd.f32 %v62, 1e-07
    %v71 = vlog2.pop %v69
    %v72 = vmul.f32 %v71, 0.6931472
    %v73 = vlog2.pop %v70
    %v74 = vmul.f32 %v73, 0.6931472
    %v75 = vmul.f32 %v57, %v57
    %v76 = vmul.f32 %v58, %v58
    %v77 = vmul.f32 %v61, %v61
    %v78 = vmul.f32 %v62, %v62
    %v79 = vmul.f32 %v77, -0.25
    %v80 = vmul.f32 %v78, -0.25
    %v81 = vmul.f32 %v79, %v66
    %v82 = vmul.f32 %v80, %v68
    %v83 = vmul.f32 %v81, %v59
    %v84 = vmul.f32 %v82, %v60
    %v85 = vmul.f32 %v75, -0.75
    %v86 = vmul.f32 %v76, -0.75
    %v87 = vmul.f32 %v85, %v72
    %v88 = vmul.f32 %v86, %v74
    %v89 = vsub.f32 1.0, %v59
    %v90 = vsub.f32 1.0, %v60
    %v91 = vmul.f32 %v87, %v89
    %v92 = vmul.f32 %v88, %v90
    %v93 = vadd.f32 %v91, %v83
    %v94 = vadd.f32 %v92, %v84
    %v95 = vadd.f32 %v93, %v94
    %v96 = vld [vmem:[#allocation7] sm:$0xff]
    %v97 = vadd.f32 %v96, %v95
    %98 = vst [vmem:[#allocation7] sm:$0xff] %v97
    // Predicated region
    $region22: #{tpu_custom_call.1} parent=1 // pred_check
      _
    $region23: #{tpu_custom_call.1} parent=1 // pred_check_branch
      %100 = sbr.rel (0) target = $region25
    $region24: #{tpu_custom_call.1} parent=1 // pred_region
      %s102 = ssub.s32 128, 128
      %103 = vsyncadd [#allocation4], %s102
      %s105 = sshll.u32 [#allocation7], 4
      %s106 = int_to_ptr.vmem [resolvable:$true] %s105
      %108 = dma.vmem_to_hbm [thread:$0]  %s106, 128, %s2, [#allocation4]
    $region25: #{tpu_custom_call.1} parent=1 // pred_fallthru
      _
    // Predicated region
    $region26: #{tpu_custom_call.1} parent=1 // pred_check
      _
    $region27: #{tpu_custom_call.1} parent=1 // pred_check_branch
      %110 = sbr.rel (0) target = $region29
    $region28: #{tpu_custom_call.1} parent=1 // pred_region
      %111 = dma.done [#allocation4], 128
    $region29: #{tpu_custom_call.1} parent=1 // pred_fallthru
      _
    %112 = vsyncpa [#allocation3], 1
    %113 = vsyncpa [#allocation6], 1
    %114 = vsyncpa [#allocation4], 1

</llo_original>
